<compile_context>
chip_gen: v7x
topology: tpu7x:2x2x1
jax: 0.10.0
libtpu: 0.0.40
codegen_flags: <defaults>
</compile_context>

<pallas_src>
import functools

import jax
import jax.numpy as jnp
from jax.experimental import pallas as pl
from jax.experimental.pallas import tpu as pltpu

HIDDEN_1 = 120
HIDDEN_2 = 80
NEG_SLOPE = 0.01  # nn.LeakyReLU default
LANE = 128


def _round_up(n, m):
    return (n + m - 1) // m * m


def _leaky_relu(x):
    return jnp.where(x > 0, x, NEG_SLOPE * x)


def class_predictor_kernel(x_ref, w1_ref, b1_ref, w2_ref, b2_ref,
                           w3_ref, b3_ref, y_ref):
    # x arrives in its native dtype (f32); cast to bf16 only for the MXU.
    x = x_ref[...].astype(jnp.bfloat16)                       # (blk, in_features)

    # fc1 + LeakyReLU  (dropout = identity at inference)
    a1 = jnp.dot(x, w1_ref[...], preferred_element_type=jnp.float32) + b1_ref[...]
    h1 = _leaky_relu(a1).astype(jnp.bfloat16)                  # (blk, 128)

    # fc2 + LeakyReLU
    a2 = jnp.dot(h1, w2_ref[...], preferred_element_type=jnp.float32) + b2_ref[...]
    h2 = _leaky_relu(a2).astype(jnp.bfloat16)                  # (blk, 128)

    # output projection -> compact (blk, num_classes) store
    y = jnp.dot(h2, w3_ref[...], preferred_element_type=jnp.float32) + b3_ref[...]
    y_ref[...] = y.astype(y_ref.dtype)


def prepare_params(w1, b1, w2, b2, w3, b3):
    """One-time padding/casting of the (static) weights -- hoisted out of the
    per-call forward.  Hidden dims padded to 128 lanes with zeros (zero weight
    cols + zero bias lanes keep padded lanes exactly 0 through LeakyReLU)."""
    in_features = w1.shape[0]
    num_classes = w3.shape[1]
    h1_pad = _round_up(HIDDEN_1, LANE)
    h2_pad = _round_up(HIDDEN_2, LANE)

    w1p = jnp.zeros((in_features, h1_pad), jnp.bfloat16)
    w1p = w1p.at[:, :HIDDEN_1].set(w1.astype(jnp.bfloat16))
    b1p = jnp.zeros((1, h1_pad), jnp.float32)
    b1p = b1p.at[:, :HIDDEN_1].set(b1.astype(jnp.float32).reshape(1, -1))

    w2p = jnp.zeros((h1_pad, h2_pad), jnp.bfloat16)
    w2p = w2p.at[:HIDDEN_1, :HIDDEN_2].set(w2.astype(jnp.bfloat16))
    b2p = jnp.zeros((1, h2_pad), jnp.float32)
    b2p = b2p.at[:, :HIDDEN_2].set(b2.astype(jnp.float32).reshape(1, -1))

    w3p = jnp.zeros((h2_pad, num_classes), jnp.bfloat16)
    w3p = w3p.at[:HIDDEN_2, :].set(w3.astype(jnp.bfloat16))
    b3p = b3.astype(jnp.float32).reshape(1, num_classes)

    return w1p, b1p, w2p, b2p, w3p, b3p


@functools.partial(jax.jit, static_argnames=("block_b",))
def class_predictor_forward(x, w1p, b1p, w2p, b2p, w3p, b3p, *, block_b=2048):
    assert block_b % 8 == 0, "block_b must be a multiple of 8 (sublane)"
    B, in_features = x.shape
    h1_pad = w1p.shape[1]
    h2_pad = w2p.shape[1]
    num_classes = w3p.shape[1]

    # Batch tiling: round B to the 8-row sublane, aim for >= 2 grid steps
    # (v7x megacore), cap at block_b.  Padding waste <= eff_block - 1 rows.
    b8 = _round_up(B, 8)
    eff_block = min(block_b, max(8, _round_up(pl.cdiv(b8, 2), 8)))
    b_pad = _round_up(b8, eff_block)
    if b_pad != B:
        x = jnp.pad(x, ((0, b_pad - B), (0, 0)))  # native dtype, no lane padding

    grid = (b_pad // eff_block,)

    # Batch streamed across the grid; weights/biases have constant index_maps
    # so the pipeline keeps them resident in VMEM across grid steps.
    in_specs = [
        pl.BlockSpec((eff_block, in_features), lambda i: (i, 0)),  # x (full K)
        pl.BlockSpec((in_features, h1_pad), lambda i: (0, 0)),     # w1
        pl.BlockSpec((1, h1_pad), lambda i: (0, 0)),               # b1
        pl.BlockSpec((h1_pad, h2_pad), lambda i: (0, 0)),          # w2
        pl.BlockSpec((1, h2_pad), lambda i: (0, 0)),               # b2
        pl.BlockSpec((h2_pad, num_classes), lambda i: (0, 0)),     # w3 (compact N)
        pl.BlockSpec((1, num_classes), lambda i: (0, 0)),          # b3
    ]
    out_spec = pl.BlockSpec((eff_block, num_classes), lambda i: (i, 0))

    y_pad = pl.pallas_call(
        class_predictor_kernel,
        out_shape=jax.ShapeDtypeStruct((b_pad, num_classes), jnp.float32),
        grid_spec=pltpu.PrefetchScalarGridSpec(
            num_scalar_prefetch=0,
            grid=grid,
            in_specs=in_specs,
            out_specs=out_spec,
        ),
        compiler_params=pltpu.CompilerParams(
            dimension_semantics=("parallel",)),
    )(x, w1p, b1p, w2p, b2p, w3p, b3p)

    return y_pad[:B]


def orthogonal_init(key, rows, cols, dtype=jnp.float32):
    """Deterministic orthogonal init (same spirit as nn.init.orthogonal_)."""
    n = max(rows, cols)
    a = jax.random.normal(key, (n, n), dtype=jnp.float32)
    q, r = jnp.linalg.qr(a)
    d = jnp.diag(r)
    q = q * jnp.where(d >= 0, 1.0, -1.0)[None, :]
    return q[:rows, :cols].astype(dtype)


def init_params(key, input_size, num_classes):
    k1, k2, k3, kb1, kb2, kb3 = jax.random.split(key, 6)
    # PyTorch nn.Linear weight is (out, in); we store the transpose (in, out).
    w1 = orthogonal_init(k1, HIDDEN_1, input_size).T          # (in, 120)
    w2 = orthogonal_init(k2, HIDDEN_2, HIDDEN_1).T            # (120, 80)
    w3 = orthogonal_init(k3, num_classes, HIDDEN_2).T         # (80, C)
    b1 = jax.random.uniform(kb1, (1, HIDDEN_1), minval=-1, maxval=1) / jnp.sqrt(input_size)
    b2 = jax.random.uniform(kb2, (1, HIDDEN_2), minval=-1, maxval=1) / jnp.sqrt(HIDDEN_1)
    b3 = jax.random.uniform(kb3, (1, num_classes), minval=-1, maxval=1) / jnp.sqrt(HIDDEN_2)
    return w1, b1, w2, b2, w3, b3


def reference_forward(x, w1, b1, w2, b2, w3, b3):
    """f32 reference using the same bf16-quantized operands as the kernel."""
    q = lambda a: a.astype(jnp.bfloat16).astype(jnp.float32)
    hi = jax.lax.Precision.HIGHEST
    h1 = _leaky_relu(jnp.dot(q(x), q(w1), precision=hi) + b1)
    h2 = _leaky_relu(jnp.dot(q(h1), q(w2), precision=hi) + b2)
    return jnp.dot(q(h2), q(w3), precision=hi) + b3


if __name__ == "__main__":
    input_size = 64
    num_classes = 10
    batch = 100      # deliberately ragged: exercises sublane batch padding

    key = jax.random.PRNGKey(0)
    kx, kp = jax.random.split(key)
    x = jax.random.normal(kx, (batch, input_size), dtype=jnp.float32)
    params = init_params(kp, input_size, num_classes)

    # One-time (static) weight padding/casting, hoisted out of the forward.
    padded = prepare_params(*params)
    padded = jax.block_until_ready(padded)

    y = class_predictor_forward(x, *padded)   # eff_block=56 -> grid=(2,)
    y = jax.block_until_ready(y)

    y_ref = reference_forward(x, *params)
    assert y.shape == (batch, num_classes)
    assert jnp.allclose(y, y_ref, atol=2e-2, rtol=2e-2), "mismatch vs reference"

    print("KERNEL_OK")
</pallas_src>

<mosaic_0001>
module attributes {stable_mosaic.version = 11 : i64} {
  func.func @class_predictor_kernel(%arg0: i32, %arg1: memref<56x64xf32, #tpu.memory_space<vmem>>, %arg2: memref<64x128xbf16, #tpu.memory_space<vmem>>, %arg3: memref<1x128xf32, #tpu.memory_space<vmem>>, %arg4: memref<128x128xbf16, #tpu.memory_space<vmem>>, %arg5: memref<1x128xf32, #tpu.memory_space<vmem>>, %arg6: memref<128x10xbf16, #tpu.memory_space<vmem>>, %arg7: memref<1x10xf32, #tpu.memory_space<vmem>>, %arg8: memref<56x10xf32, #tpu.memory_space<vmem>>) attributes {dimension_semantics = [#tpu.dimension_semantics<parallel>], iteration_bounds = array<i64: 2>, scalar_prefetch = 0 : i64, scratch_operands = 0 : i64, tpu.core_type = #tpu.core_type<tc>, window_params = [{transform_indices = @transform_0, window_bounds = array<i64: 56, 64>}, {pipeline_mode = #tpu.pipeline_mode<synchronous>, transform_indices = @transform_1, window_bounds = array<i64: 64, 128>}, {pipeline_mode = #tpu.pipeline_mode<synchronous>, transform_indices = @transform_2, window_bounds = array<i64: 1, 128>}, {pipeline_mode = #tpu.pipeline_mode<synchronous>, transform_indices = @transform_3, window_bounds = array<i64: 128, 128>}, {pipeline_mode = #tpu.pipeline_mode<synchronous>, transform_indices = @transform_4, window_bounds = array<i64: 1, 128>}, {pipeline_mode = #tpu.pipeline_mode<synchronous>, transform_indices = @transform_5, window_bounds = array<i64: 128, 10>}, {pipeline_mode = #tpu.pipeline_mode<synchronous>, transform_indices = @transform_6, window_bounds = array<i64: 1, 10>}, {transform_indices = @transform_7, window_bounds = array<i64: 56, 10>}]} {
    %c0 = arith.constant 0 : index
    %c0_0 = arith.constant 0 : index
    %0 = vector.load %arg1[%c0, %c0_0] : memref<56x64xf32, #tpu.memory_space<vmem>>, vector<56x64xf32>
    %1 = arith.truncf %0 : vector<56x64xf32> to vector<56x64xbf16>
    %c0_1 = arith.constant 0 : index
    %c0_2 = arith.constant 0 : index
    %2 = vector.load %arg2[%c0_1, %c0_2] : memref<64x128xbf16, #tpu.memory_space<vmem>>, vector<64x128xbf16>
    %cst = arith.constant dense<0.000000e+00> : vector<56x128xf32>
    %3 = tpu.matmul %1, %2, %cst {dimension_numbers = #tpu.dot_dimension_numbers<[1], [0], [0], [1], [0, 0, 1, 1], [], []>} : vector<56x64xbf16>, vector<64x128xbf16>, vector<56x128xf32> -> vector<56x128xf32>
    %c0_3 = arith.constant 0 : index
    %c0_4 = arith.constant 0 : index
    %4 = vector.load %arg3[%c0_3, %c0_4] : memref<1x128xf32, #tpu.memory_space<vmem>>, vector<1x128xf32>
    %5 = vector.broadcast %4 : vector<1x128xf32> to vector<56x128xf32>
    %6 = arith.addf %3, %5 : vector<56x128xf32>
    %cst_5 = arith.constant 0.000000e+00 : f32
    %7 = vector.broadcast %cst_5 : f32 to vector<56x128xf32>
    %8 = arith.cmpf ogt, %6, %7 : vector<56x128xf32>
    %cst_6 = arith.constant 0.00999999977 : f32
    %9 = vector.broadcast %cst_6 : f32 to vector<56x128xf32>
    %10 = arith.mulf %9, %6 : vector<56x128xf32>
    %11 = arith.select %8, %6, %10 : vector<56x128xi1>, vector<56x128xf32>
    %12 = arith.truncf %11 : vector<56x128xf32> to vector<56x128xbf16>
    %c0_7 = arith.constant 0 : index
    %c0_8 = arith.constant 0 : index
    %13 = vector.load %arg4[%c0_7, %c0_8] : memref<128x128xbf16, #tpu.memory_space<vmem>>, vector<128x128xbf16>
    %cst_9 = arith.constant dense<0.000000e+00> : vector<56x128xf32>
    %14 = tpu.matmul %12, %13, %cst_9 {dimension_numbers = #tpu.dot_dimension_numbers<[1], [0], [0], [1], [0, 0, 1, 1], [], []>} : vector<56x128xbf16>, vector<128x128xbf16>, vector<56x128xf32> -> vector<56x128xf32>
    %c0_10 = arith.constant 0 : index
    %c0_11 = arith.constant 0 : index
    %15 = vector.load %arg5[%c0_10, %c0_11] : memref<1x128xf32, #tpu.memory_space<vmem>>, vector<1x128xf32>
    %16 = vector.broadcast %15 : vector<1x128xf32> to vector<56x128xf32>
    %17 = arith.addf %14, %16 : vector<56x128xf32>
    %cst_12 = arith.constant 0.000000e+00 : f32
    %18 = vector.broadcast %cst_12 : f32 to vector<56x128xf32>
    %19 = arith.cmpf ogt, %17, %18 : vector<56x128xf32>
    %cst_13 = arith.constant 0.00999999977 : f32
    %20 = vector.broadcast %cst_13 : f32 to vector<56x128xf32>
    %21 = arith.mulf %20, %17 : vector<56x128xf32>
    %22 = arith.select %19, %17, %21 : vector<56x128xi1>, vector<56x128xf32>
    %23 = arith.truncf %22 : vector<56x128xf32> to vector<56x128xbf16>
    %c0_14 = arith.constant 0 : index
    %c0_15 = arith.constant 0 : index
    %24 = vector.load %arg6[%c0_14, %c0_15] : memref<128x10xbf16, #tpu.memory_space<vmem>>, vector<128x10xbf16>
    %cst_16 = arith.constant dense<0.000000e+00> : vector<56x10xf32>
    %25 = tpu.matmul %23, %24, %cst_16 {dimension_numbers = #tpu.dot_dimension_numbers<[1], [0], [0], [1], [0, 0, 1, 1], [], []>} : vector<56x128xbf16>, vector<128x10xbf16>, vector<56x10xf32> -> vector<56x10xf32>
    %c0_17 = arith.constant 0 : index
    %c0_18 = arith.constant 0 : index
    %26 = vector.load %arg7[%c0_17, %c0_18] : memref<1x10xf32, #tpu.memory_space<vmem>>, vector<1x10xf32>
    %27 = vector.broadcast %26 : vector<1x10xf32> to vector<56x10xf32>
    %28 = arith.addf %25, %27 : vector<56x10xf32>
    %c0_19 = arith.constant 0 : index
    %c0_20 = arith.constant 0 : index
    %29 = vector.load %arg8[%c0_19, %c0_20] : memref<56x10xf32, #tpu.memory_space<vmem>>, vector<56x10xf32>
    tpu.vector_store %arg8[%c0_19, %c0_20], %28 {strides = array<i32>} : memref<56x10xf32, #tpu.memory_space<vmem>>, vector<56x10xf32>,
    return
  }
  func.func @transform_0(%arg0: i32) -> (i32, i32) {
    %c0_i32 = arith.constant 0 : i32
    %c0_i32_0 = arith.constant 0 : i32
    return %arg0, %c0_i32 : i32, i32
  }
  func.func @transform_1(%arg0: i32) -> (i32, i32) {
    %c0_i32 = arith.constant 0 : i32
    %c0_i32_0 = arith.constant 0 : i32
    %c0_i32_1 = arith.constant 0 : i32
    return %c0_i32, %c0_i32_0 : i32, i32
  }
  func.func @transform_2(%arg0: i32) -> (i32, i32) {
    %c0_i32 = arith.constant 0 : i32
    %c0_i32_0 = arith.constant 0 : i32
    %c0_i32_1 = arith.constant 0 : i32
    return %c0_i32, %c0_i32_0 : i32, i32
  }
  func.func @transform_3(%arg0: i32) -> (i32, i32) {
    %c0_i32 = arith.constant 0 : i32
    %c0_i32_0 = arith.constant 0 : i32
    %c0_i32_1 = arith.constant 0 : i32
    return %c0_i32, %c0_i32_0 : i32, i32
  }
  func.func @transform_4(%arg0: i32) -> (i32, i32) {
    %c0_i32 = arith.constant 0 : i32
    %c0_i32_0 = arith.constant 0 : i32
    %c0_i32_1 = arith.constant 0 : i32
    return %c0_i32, %c0_i32_0 : i32, i32
  }
  func.func @transform_5(%arg0: i32) -> (i32, i32) {
    %c0_i32 = arith.constant 0 : i32
    %c0_i32_0 = arith.constant 0 : i32
    %c0_i32_1 = arith.constant 0 : i32
    return %c0_i32, %c0_i32_0 : i32, i32
  }
  func.func @transform_6(%arg0: i32) -> (i32, i32) {
    %c0_i32 = arith.constant 0 : i32
    %c0_i32_0 = arith.constant 0 : i32
    %c0_i32_1 = arith.constant 0 : i32
    return %c0_i32, %c0_i32_0 : i32, i32
  }
  func.func @transform_7(%arg0: i32) -> (i32, i32) {
    %c0_i32 = arith.constant 0 : i32
    %c0_i32_0 = arith.constant 0 : i32
    return %arg0, %c0_i32 : i32, i32
  }
}

</mosaic_0001>

<llo_original>
// kernel: class_predictor_forward.1
$region0: #{class_predictor_forward.1}
  #allocation0 [shape = 'u32[]', space=smem, size = 0x4, offset = 0x4, fixed_abs, tag = 'smem constant byte address 0x4 - core index']
  #allocation1 [shape = 'u32[144,128]{1,0:T(1,128)}', space=vmem, size = 0x12000, scoped, tag = 'internal scratch']
  %s0 = inlined_call_operand.vmem [shape: f32[112,64], index: 0, kind: input, shape index: {}]
  %s1 = inlined_call_operand.vmem [shape: bf16[64,128], index: 1, kind: input, shape index: {}]
  %s2 = inlined_call_operand.vmem [shape: f32[1,128], index: 2, kind: input, shape index: {}]
  %s3 = inlined_call_operand.vmem [shape: bf16[128,128], index: 3, kind: input, shape index: {}]
  %s4 = inlined_call_operand.vmem [shape: f32[1,128], index: 4, kind: input, shape index: {}]
  %s5 = inlined_call_operand.vmem [shape: bf16[128,10], index: 5, kind: input, shape index: {}]
  %s6 = inlined_call_operand.vmem [shape: f32[1,10], index: 6, kind: input, shape index: {}]
  %s7 = inlined_call_operand.vmem [shape: f32[112,10], index: 7, kind: output, shape index: {}]
  %s8 = sld [smem:[#allocation0]]
  $region61: #{class_predictor_forward.1} parent=0
    _
  %s10 = ssub.s32 1, %s8
  %s11 = scalar_select 0, %s10, %s8
  loop: start=0, step=1, limit=4
  $region2: #{class_predictor_forward.1} parent=0 // loop_pre_header
    _
  $region3: #{class_predictor_forward.1} parent=0 // loop_header
    %s13 = sphi 0, %s17
    %p14 = scmp.ge.s32.totalorder %s13, 4
    %s23 = sphi 0, %s25
    %s26 = sphi 0, %s23
    %s27 = sphi 0, %s26
    %s43 = sphi 0, %s27
    %s47 = sphi 0, %s47
    %s49 = sphi 0, %s47
    %s50 = sphi 0, %s49
    %s64 = sphi 0, %s50
    %s68 = sphi 0, %s68
    %s70 = sphi 0, %s68
    %s71 = sphi 0, %s70
    %s85 = sphi 0, %s71
    %s89 = sphi 0, %s89
    %s91 = sphi 0, %s89
    %s92 = sphi 0, %s91
    %s106 = sphi 0, %s92
    %s110 = sphi 0, %s110
    %s112 = sphi 0, %s110
    %s113 = sphi 0, %s112
    %s127 = sphi 0, %s113
    %s131 = sphi 0, %s131
    %s133 = sphi 0, %s131
    %s134 = sphi 0, %s133
    %s148 = sphi 0, %s134
    %s152 = sphi 0, %s152
    %s154 = sphi 0, %s152
    %s155 = sphi 0, %s154
    %s169 = sphi 0, %s155
    %s175 = sphi 0, %s177
    %s178 = sphi 0, %s175
    %s179 = sphi 0, %s178
    %s195 = sphi 0, %s179
  $region4: #{class_predictor_forward.1} parent=0 // loop_header_branch
    %16 = sbr.rel (%p14) target = $region8
  $region5: #{class_predictor_forward.1} parent=0 // loop_body
    %s18 = ssub.s32 %s13, 1
    %s19 = ssub.s32 %s13, 2
    %s20 = sadd.s32 %s13, 1
    %s21 = ssub.s32 %s13, %s20
    %p22 = scmp.eq.s32.totalorder %s21, 0
    %s24 = sadd.s32 %s23, 1
    %s25 = scalar_select %p22, %s23, %s24
    %p28 = pneg %p22
    %p29 = scmp.eq.s32.totalorder %s13, 1
    %p30 = por %p28, %p29
    %p31 = scmp.ne.s32.totalorder %s23, %s26
    %p32 = scmp.eq.s32.totalorder %s13, 0
    %p33 = por %p31, %p32
    %p34 = scmp.ne.s32.totalorder %s23, %s26
    %p35 = scmp.eq.s32.totalorder %s18, 1
    %p36 = por %p34, %p35
    %p37 = scmp.ne.s32.totalorder %s26, %s27
    %p38 = scmp.eq.s32.totalorder %s18, 0
    %p39 = por %p37, %p38
    %p40 = scmp.ne.s32.totalorder %s26, %s27
    %p41 = scmp.eq.s32.totalorder %s19, 1
    %p42 = por %p40, %p41
    %p44 = scmp.ne.s32.totalorder %s27, %s43
    %p45 = scmp.eq.s32.totalorder %s19, 0
    %p46 = por %p44, %p45
    %s48 = sadd.s32 %s47, 1
    %p51 = scmp.eq.s32.totalorder %s13, 1
    %p52 = scmp.ne.s32.totalorder %s47, %s49
    %p53 = scmp.eq.s32.totalorder %s13, 0
    %p54 = por %p52, %p53
    %p55 = scmp.ne.s32.totalorder %s47, %s49
    %p56 = scmp.eq.s32.totalorder %s18, 1
    %p57 = por %p55, %p56
    %p58 = scmp.ne.s32.totalorder %s49, %s50
    %p59 = scmp.eq.s32.totalorder %s18, 0
    %p60 = por %p58, %p59
    %p61 = scmp.ne.s32.totalorder %s49, %s50
    %p62 = scmp.eq.s32.totalorder %s19, 1
    %p63 = por %p61, %p62
    %p65 = scmp.ne.s32.totalorder %s50, %s64
    %p66 = scmp.eq.s32.totalorder %s19, 0
    %p67 = por %p65, %p66
    %s69 = sadd.s32 %s68, 1
    %p72 = scmp.eq.s32.totalorder %s13, 1
    %p73 = scmp.ne.s32.totalorder %s68, %s70
    %p74 = scmp.eq.s32.totalorder %s13, 0
    %p75 = por %p73, %p74
    %p76 = scmp.ne.s32.totalorder %s68, %s70
    %p77 = scmp.eq.s32.totalorder %s18, 1
    %p78 = por %p76, %p77
    %p79 = scmp.ne.s32.totalorder %s70, %s71
    %p80 = scmp.eq.s32.totalorder %s18, 0
    %p81 = por %p79, %p80
    %p82 = scmp.ne.s32.totalorder %s70, %s71
    %p83 = scmp.eq.s32.totalorder %s19, 1
    %p84 = por %p82, %p83
    %p86 = scmp.ne.s32.totalorder %s71, %s85
    %p87 = scmp.eq.s32.totalorder %s19, 0
    %p88 = por %p86, %p87
    %s90 = sadd.s32 %s89, 1
    %p93 = scmp.eq.s32.totalorder %s13, 1
    %p94 = scmp.ne.s32.totalorder %s89, %s91
    %p95 = scmp.eq.s32.totalorder %s13, 0
    %p96 = por %p94, %p95
    %p97 = scmp.ne.s32.totalorder %s89, %s91
    %p98 = scmp.eq.s32.totalorder %s18, 1
    %p99 = por %p97, %p98
    %p100 = scmp.ne.s32.totalorder %s91, %s92
    %p101 = scmp.eq.s32.totalorder %s18, 0
    %p102 = por %p100, %p101
    %p103 = scmp.ne.s32.totalorder %s91, %s92
    %p104 = scmp.eq.s32.totalorder %s19, 1
    %p105 = por %p103, %p104
    %p107 = scmp.ne.s32.totalorder %s92, %s106
    %p108 = scmp.eq.s32.totalorder %s19, 0
    %p109 = por %p107, %p108
    %s111 = sadd.s32 %s110, 1
    %p114 = scmp.eq.s32.totalorder %s13, 1
    %p115 = scmp.ne.s32.totalorder %s110, %s112
    %p116 = scmp.eq.s32.totalorder %s13, 0
    %p117 = por %p115, %p116
    %p118 = scmp.ne.s32.totalorder %s110, %s112
    %p119 = scmp.eq.s32.totalorder %s18, 1
    %p120 = por %p118, %p119
    %p121 = scmp.ne.s32.totalorder %s112, %s113
    %p122 = scmp.eq.s32.totalorder %s18, 0
    %p123 = por %p121, %p122
    %p124 = scmp.ne.s32.totalorder %s112, %s113
    %p125 = scmp.eq.s32.totalorder %s19, 1
    %p126 = por %p124, %p125
    %p128 = scmp.ne.s32.totalorder %s113, %s127
    %p129 = scmp.eq.s32.totalorder %s19, 0
    %p130 = por %p128, %p129
    %s132 = sadd.s32 %s131, 1
    %p135 = scmp.eq.s32.totalorder %s13, 1
    %p136 = scmp.ne.s32.totalorder %s131, %s133
    %p137 = scmp.eq.s32.totalorder %s13, 0
    %p138 = por %p136, %p137
    %p139 = scmp.ne.s32.totalorder %s131, %s133
    %p140 = scmp.eq.s32.totalorder %s18, 1
    %p141 = por %p139, %p140
    %p142 = scmp.ne.s32.totalorder %s133, %s134
    %p143 = scmp.eq.s32.totalorder %s18, 0
    %p144 = por %p142, %p143
    %p145 = scmp.ne.s32.totalorder %s133, %s134
    %p146 = scmp.eq.s32.totalorder %s19, 1
    %p147 = por %p145, %p146
    %p149 = scmp.ne.s32.totalorder %s134, %s148
    %p150 = scmp.eq.s32.totalorder %s19, 0
    %p151 = por %p149, %p150
    %s153 = sadd.s32 %s152, 1
    %p156 = scmp.eq.s32.totalorder %s13, 1
    %p157 = scmp.ne.s32.totalorder %s152, %s154
    %p158 = scmp.eq.s32.totalorder %s13, 0
    %p159 = por %p157, %p158
    %p160 = scmp.ne.s32.totalorder %s152, %s154
    %p161 = scmp.eq.s32.totalorder %s18, 1
    %p162 = por %p160, %p161
    %p163 = scmp.ne.s32.totalorder %s154, %s155
    %p164 = scmp.eq.s32.totalorder %s18, 0
    %p165 = por %p163, %p164
    %p166 = scmp.ne.s32.totalorder %s154, %s155
    %p167 = scmp.eq.s32.totalorder %s19, 1
    %p168 = por %p166, %p167
    %p170 = scmp.ne.s32.totalorder %s155, %s169
    %p171 = scmp.eq.s32.totalorder %s19, 0
    %p172 = por %p170, %p171
    %s173 = ssub.s32 %s13, %s20
    %p174 = scmp.eq.s32.totalorder %s173, 0
    %s176 = sadd.s32 %s175, 1
    %s177 = scalar_select %p174, %s175, %s176
    %p180 = pneg %p174
    %p181 = scmp.eq.s32.totalorder %s13, 1
    %p182 = por %p180, %p181
    %p183 = scmp.ne.s32.totalorder %s175, %s178
    %p184 = scmp.eq.s32.totalorder %s13, 0
    %p185 = por %p183, %p184
    %p186 = scmp.ne.s32.totalorder %s175, %s178
    %p187 = scmp.eq.s32.totalorder %s18, 1
    %p188 = por %p186, %p187
    %p189 = scmp.ne.s32.totalorder %s178, %s179
    %p190 = scmp.eq.s32.totalorder %s18, 0
    %p191 = por %p189, %p190
    %p192 = scmp.ne.s32.totalorder %s178, %s179
    %p193 = scmp.eq.s32.totalorder %s19, 1
    %p194 = por %p192, %p193
    %p196 = scmp.ne.s32.totalorder %s179, %s195
    %p197 = scmp.eq.s32.totalorder %s19, 0
    %p198 = por %p196, %p197
    %p199 = scmp.le.s32.totalorder 1, %s13
    %p200 = scmp.lt.s32.totalorder %s13, 3
    %p201 = pnand %p199, %p200
    %p202 = pneg %p201
    // Predicated region
    $region9: #{class_predictor_forward.1} parent=5 // pred_check
      _
    $region10: #{class_predictor_forward.1} parent=5 // pred_check_branch
      %204 = sbr.rel (%p201) target = $region12
    $region11: #{class_predictor_forward.1} parent=5 // pred_region
      %s205 = ssub.s32 %s13, 1
      // Predicated region
      $region13: #{class_predictor_forward.1} parent=11 // pred_check
        %p206 = pneg %p60
      $region14: #{class_predictor_forward.1} parent=11 // pred_check_branch
        %208 = sbr.rel (%p206) target = $region16
      $region15: #{class_predictor_forward.1} parent=11 // pred_region
        _
      $region16: #{class_predictor_forward.1} parent=11 // pred_fallthru
        _
      // Predicated region
      $region17: #{class_predictor_forward.1} parent=11 // pred_check
        %p209 = pneg %p81
      $region18: #{class_predictor_forward.1} parent=11 // pred_check_branch
        %211 = sbr.rel (%p209) target = $region20
      $region19: #{class_predictor_forward.1} parent=11 // pred_region
        _
      $region20: #{class_predictor_forward.1} parent=11 // pred_fallthru
        _
      // Predicated region
      $region21: #{class_predictor_forward.1} parent=11 // pred_check
        %p212 = pneg %p102
      $region22: #{class_predictor_forward.1} parent=11 // pred_check_branch
        %214 = sbr.rel (%p212) target = $region24
      $region23: #{class_predictor_forward.1} parent=11 // pred_region
        _
      $region24: #{class_predictor_forward.1} parent=11 // pred_fallthru
        _
      // Predicated region
      $region25: #{class_predictor_forward.1} parent=11 // pred_check
        %p215 = pneg %p123
      $region26: #{class_predictor_forward.1} parent=11 // pred_check_branch
        %217 = sbr.rel (%p215) target = $region28
      $region27: #{class_predictor_forward.1} parent=11 // pred_region
        _
      $region28: #{class_predictor_forward.1} parent=11 // pred_fallthru
        _
      // Predicated region
      $region29: #{class_predictor_forward.1} parent=11 // pred_check
        %p218 = pneg %p144
      $region30: #{class_predictor_forward.1} parent=11 // pred_check_branch
        %220 = sbr.rel (%p218) target = $region32
      $region31: #{class_predictor_forward.1} parent=11 // pred_region
        _
      $region32: #{class_predictor_forward.1} parent=11 // pred_fallthru
        _
      // Predicated region
      $region33: #{class_predictor_forward.1} parent=11 // pred_check
        %p221 = pneg %p165
      $region34: #{class_predictor_forward.1} parent=11 // pred_check_branch
        %223 = sbr.rel (%p221) target = $region36
      $region35: #{class_predictor_forward.1} parent=11 // pred_region
        _
      $region36: #{class_predictor_forward.1} parent=11 // pred_fallthru
        _
    $region12: #{class_predictor_forward.1} parent=5 // pred_fallthru
      _
    %p224 = scmp.lt.s32.totalorder %s13, 2
    // Predicated region
    $region37: #{class_predictor_forward.1} parent=5 // pred_check
      %p225 = pneg %p224
    $region38: #{class_predictor_forward.1} parent=5 // pred_check_branch
      %227 = sbr.rel (%p225) target = $region40
    $region39: #{class_predictor_forward.1} parent=5 // pred_region
      // Predicated region
      $region41: #{class_predictor_forward.1} parent=39 // pred_check
        %p228 = pneg %p33
      $region42: #{class_predictor_forward.1} parent=39 // pred_check_branch
        %230 = sbr.rel (%p228) target = $region44
      $region43: #{class_predictor_forward.1} parent=39 // pred_region
        %s231 = smul.u32 7, %s13
        %p232 = scmp.lt.s32.totalorder %s231, 13
        %s233 = scalar_select %p232, %s231, 13
        %s234 = smul.addr %s233, 8
        %s235 = scalar_lea.vmem %s0, %s234
        %s236 = smul.u32 7, %s13
      $region44: #{class_predictor_forward.1} parent=39 // pred_fallthru
        _
    $region40: #{class_predictor_forward.1} parent=5 // pred_fallthru
      _
    %p237 = scmp.le.s32.totalorder 1, %s13
    %p238 = scmp.lt.s32.totalorder %s13, 3
    %p239 = pnand %p237, %p238
    %p240 = pneg %p239
    // Predicated region
    $region45: #{class_predictor_forward.1} parent=5 // pred_check
      _
    $region46: #{class_predictor_forward.1} parent=5 // pred_check_branch
      %242 = sbr.rel (%p239) target = $region48
    $region47: #{class_predictor_forward.1} parent=5 // pred_region
      %s243 = ssub.s32 %s13, 1
      %s244 = smul.u32 7, %s18
      %p245 = scmp.lt.s32.totalorder %s244, 13
      %s246 = scalar_select %p245, %s244, 13
      %s247 = smul.addr %s246, 8
      %s248 = scalar_lea.vmem %s0, %s247
      %p249 = pneg %p39
      %p250 = pneg %p36
      %p251 = pneg %p60
      %p252 = pneg %p57
      %p253 = pneg %p81
      %p254 = pneg %p78
      %p255 = pneg %p102
      %p256 = pneg %p99
      %p257 = pneg %p123
      %p258 = pneg %p120
      %p259 = pneg %p144
      %p260 = pneg %p141
      %p261 = pneg %p165
      %p262 = pneg %p162
      %p263 = pneg %p191
      %p264 = pneg %p188
      %s265 = smul.u32 7, %s18
      %p266 = scmp.lt.s32.totalorder %s265, 13
      %s267 = scalar_select %p266, %s265, 13
      %s268 = smul.addr %s267, 8
      %s269 = scalar_lea.vmem %s7, %s268
      %s270 = smul.u32 7, %s18
      %p271 = scmp.lt.s32.totalorder %s270, 13
      %s272 = scalar_select %p271, %s270, 13
      %s273 = smul.addr %s272, 8
      %s274 = scalar_lea.vmem %s0, %s273
      %s275 = smul.u32 7, %s18
      %s276 = smul.u32 7, %s18
      %p277 = scmp.lt.s32.totalorder %s276, 13
      %s278 = scalar_select %p277, %s276, 13
      %s279 = smul.addr %s278, 8
      %s280 = scalar_lea.vmem %s7, %s279
      %s281 = smul.u32 7, %s18
      %v283 = vld [vmem:[%s274] sm:$0xff]
      %v284 = vld [vmem:[%s274 + $0x8] sm:$0xff]
      %v285 = vld [vmem:[%s274 + $0x10] sm:$0xff]
      %v286 = vld [vmem:[%s274 + $0x18] sm:$0xff]
      %v287 = vld [vmem:[%s274 + $0x20] sm:$0xff]
      %v288 = vld [vmem:[%s274 + $0x28] sm:$0xff]
      %v289 = vld [vmem:[%s274 + $0x30] sm:$0xff]
      %v290 = vpack.c.bf16 %v284, %v283
      %v291 = vpack.c.bf16 %v286, %v285
      %v292 = vpack.c.bf16 %v288, %v287
      %v293 = vpack.c.bf16 %v289, %v289
      %v294 = vld [vmem:[%s1] sm:$0xf]
      %v295 = vld [vmem:[%s1 + $0x4] sm:$0xf]
      %v296 = vld [vmem:[%s1 + $0x8] sm:$0xf]
      %v297 = vld [vmem:[%s1 + $0xc] sm:$0xf]
      %v298 = vld [vmem:[%s1 + $0x10] sm:$0xf]
      %v299 = vld [vmem:[%s1 + $0x14] sm:$0xf]
      %v300 = vld [vmem:[%s1 + $0x18] sm:$0xf]
      %v301 = vld [vmem:[%s1 + $0x1c] sm:$0xf]
      %v302 = vld [vmem:[%s2] sm:$0x1]
      %v304 = vlaneseq
      %v305 = vshrl.u32 %v304, 7
      %v306 = vsub.s32 0, %v305
      %v307 = vrot.slane %v302, %v306
      %v317 = vunpack.c.l.b16 %v294
      %v318 = vunpack.c.l.b16 %v295
      %v319 = vunpack.c.l.b16 %v296
      %v320 = vunpack.c.l.b16 %v297
      %v321 = vunpack.c.l.b16 %v298
      %v322 = vunpack.c.l.b16 %v299
      %v323 = vunpack.c.l.b16 %v300
      %v324 = vunpack.c.l.b16 %v301
      %v325 = vpack.c.b16 %v318, %v317
      %v326 = vpack.c.b16 %v320, %v319
      %v327 = vpack.c.b16 %v322, %v321
      %v328 = vpack.c.b16 %v324, %v323
      %vm333 = vcmask 523264
      %v335 = vsel %vm333, %v290, 0
      %v338 = vsel %vm333, %v291, 0
      %v341 = vsel %vm333, %v292, 0
      %v344 = vsel %vm333, %v293, 0
      %346 = vmatprep.subr.bf16.mxu0 0
      %347 = vmatpush1.bf16.msra.mxu0 %v325
      %348 = vmatprep.subr.bf16.mxu0 0
      %349 = vmatpush1.bf16.msra.mxu0 %v326
      %350 = vmatprep.subr.bf16.mxu0 0
      %351 = vmatpush1.bf16.msra.mxu0 %v327
      %352 = vmatprep.subr.bf16.mxu0 0
      %353 = vmatpush1.bf16.msra.mxu0 %v328
      %354 = vmatprep.subr.bf16.mxu0 0
      %355 = vmatpush1.bf16.msra.mxu0 0
      %356 = vmatprep.subr.bf16.mxu0 0
      %357 = vmatpush1.bf16.msra.mxu0 0
      %358 = vmatprep.subr.bf16.mxu0 0
      %359 = vmatpush1.bf16.msra.mxu0 0
      %360 = vmatprep.subr.bf16.mxu0 0
      %361 = vmatpush1.bf16.msra.mxu0 0
      %362 = vmatprep.subr.bf16.mxu0 0
      %363 = vmatpush1.bf16.msra.mxu0 0
      %364 = vmatprep.subr.bf16.mxu0 0
      %365 = vmatpush1.bf16.msra.mxu0 0
      %366 = vmatprep.subr.bf16.mxu0 0
      %367 = vmatpush1.bf16.msra.mxu0 0
      %368 = vmatprep.subr.bf16.mxu0 0
      %369 = vmatpush1.bf16.msra.mxu0 0
      %370 = vmatprep.subr.bf16.mxu0 0
      %371 = vmatpush1.bf16.msra.mxu0 0
      %372 = vmatprep.subr.bf16.mxu0 0
      %373 = vmatpush1.bf16.msra.mxu0 0
      %374 = vmatprep.subr.bf16.mxu0 0
      %375 = vmatpush1.bf16.msra.mxu0 0
      %376 = vmatprep.subr.bf16.mxu0 0
      %377 = vmatpush1.bf16.msra.mxu0 0
      %378 = vmatprep.mubr.bf16.mxu0 0
      %379 = vmatmul.mubr.bf16.gmra.mrb[0].mxu0 %v335
      %v380 = vpop.f32.mrb[0].mxu0
      %v381 = vadd.f32 %v307, %v380
      %v382 = vpop.f32.mrb[0].mxu0
      %v383 = vpop.f32.mrb[0].mxu0
      %v384 = vadd.f32 %v307, %v383
      %v385 = vpop.f32.mrb[0].mxu0
      %386 = vmatprep.mubr.bf16.mxu0 0
      %387 = vmatmul.mubr.bf16.gmra.mrb[0].mxu0 %v338
      %v388 = vpop.f32.mrb[0].mxu0
      %v389 = vadd.f32 %v307, %v388
      %v390 = vpop.f32.mrb[0].mxu0
      %v391 = vpop.f32.mrb[0].mxu0
      %v392 = vadd.f32 %v307, %v391
      %v393 = vpop.f32.mrb[0].mxu0
      %394 = vmatprep.mubr.bf16.mxu0 0
      %395 = vmatmul.mubr.bf16.gmra.mrb[0].mxu0 %v341
      %v396 = vpop.f32.mrb[0].mxu0
      %v397 = vadd.f32 %v307, %v396
      %v398 = vpop.f32.mrb[0].mxu0
      %v399 = vpop.f32.mrb[0].mxu0
      %v400 = vadd.f32 %v307, %v399
      %v401 = vpop.f32.mrb[0].mxu0
      %402 = vmatprep.mubr.bf16.mxu0 0
      %403 = vmatmul.mubr.bf16.gmra.mrb[0].mxu0 %v344
      %v404 = vpop.f32.mrb[0].mxu0
      %v405 = vadd.f32 %v307, %v404
      %v406 = vpop.f32.mrb[0].mxu0
      %v407 = vpop.f32.mrb[0].mxu0
      %v408 = vpop.f32.mrb[0].mxu0
      %409 = vdwg.mxu0
      %vm410 = vcmp.gt.f32.partialorder %v381, 0.0
      %vm411 = vcmp.gt.f32.partialorder %v384, 0.0
      %vm412 = vcmp.gt.f32.partialorder %v389, 0.0
      %vm413 = vcmp.gt.f32.partialorder %v392, 0.0
      %vm414 = vcmp.gt.f32.partialorder %v397, 0.0
      %vm415 = vcmp.gt.f32.partialorder %v400, 0.0
      %vm416 = vcmp.gt.f32.partialorder %v405, 0.0
      %v417 = vmul.f32 %v381, 0.01
      %v418 = vmul.f32 %v384, 0.01
      %v419 = vmul.f32 %v389, 0.01
      %v420 = vmul.f32 %v392, 0.01
      %v421 = vmul.f32 %v397, 0.01
      %v422 = vmul.f32 %v400, 0.01
      %v423 = vmul.f32 %v405, 0.01
      %v424 = vsel %vm410, %v381, %v417
      %v425 = vsel %vm411, %v384, %v418
      %v426 = vsel %vm412, %v389, %v419
      %v427 = vsel %vm413, %v392, %v420
      %v428 = vsel %vm414, %v397, %v421
      %v429 = vsel %vm415, %v400, %v422
      %v430 = vsel %vm416, %v405, %v423
      %v431 = vpack.c.bf16 %v425, %v424
      %v432 = vpack.c.bf16 %v427, %v426
      %v433 = vpack.c.bf16 %v429, %v428
      %v434 = vpack.c.bf16 %v430, %v430
      %v435 = vld [vmem:[%s3] sm:$0xf]
      %v436 = vld [vmem:[%s3 + $0x4] sm:$0xf]
      %v437 = vld [vmem:[%s3 + $0x8] sm:$0xf]
      %v438 = vld [vmem:[%s3 + $0xc] sm:$0xf]
      %v439 = vld [vmem:[%s3 + $0x10] sm:$0xf]
      %v440 = vld [vmem:[%s3 + $0x14] sm:$0xf]
      %v441 = vld [vmem:[%s3 + $0x18] sm:$0xf]
      %v442 = vld [vmem:[%s3 + $0x1c] sm:$0xf]
      %v443 = vld [vmem:[%s3 + $0x20] sm:$0xf]
      %v444 = vld [vmem:[%s3 + $0x24] sm:$0xf]
      %v445 = vld [vmem:[%s3 + $0x28] sm:$0xf]
      %v446 = vld [vmem:[%s3 + $0x2c] sm:$0xf]
      %v447 = vld [vmem:[%s3 + $0x30] sm:$0xf]
      %v448 = vld [vmem:[%s3 + $0x34] sm:$0xf]
      %v449 = vld [vmem:[%s3 + $0x38] sm:$0xf]
      %v450 = vld [vmem:[%s3 + $0x3c] sm:$0xf]
      %v451 = vld [vmem:[%s4] sm:$0x1]
      %v453 = vlaneseq
      %v454 = vshrl.u32 %v453, 7
      %v455 = vsub.s32 0, %v454
      %v456 = vrot.slane %v451, %v455
      %v474 = vunpack.c.l.b16 %v435
      %v475 = vunpack.c.l.b16 %v436
      %v476 = vunpack.c.l.b16 %v437
      %v477 = vunpack.c.l.b16 %v438
      %v478 = vunpack.c.l.b16 %v439
      %v479 = vunpack.c.l.b16 %v440
      %v480 = vunpack.c.l.b16 %v441
      %v481 = vunpack.c.l.b16 %v442
      %v482 = vunpack.c.l.b16 %v443
      %v483 = vunpack.c.l.b16 %v444
      %v484 = vunpack.c.l.b16 %v445
      %v485 = vunpack.c.l.b16 %v446
      %v486 = vunpack.c.l.b16 %v447
      %v487 = vunpack.c.l.b16 %v448
      %v488 = vunpack.c.l.b16 %v449
      %v489 = vunpack.c.l.b16 %v450
      %v490 = vpack.c.b16 %v475, %v474
      %v491 = vpack.c.b16 %v477, %v476
      %v492 = vpack.c.b16 %v479, %v478
      %v493 = vpack.c.b16 %v481, %v480
      %v494 = vpack.c.b16 %v483, %v482
      %v495 = vpack.c.b16 %v485, %v484
      %v496 = vpack.c.b16 %v487, %v486
      %v497 = vpack.c.b16 %v489, %v488
      %506 = vmatprep.subr.bf16.mxu0 0
      %507 = vmatpush1.bf16.msra.mxu0 %v490
      %508 = vmatprep.subr.bf16.mxu0 0
      %509 = vmatpush1.bf16.msra.mxu0 %v491
      %510 = vmatprep.subr.bf16.mxu0 0
      %511 = vmatpush1.bf16.msra.mxu0 %v492
      %512 = vmatprep.subr.bf16.mxu0 0
      %513 = vmatpush1.bf16.msra.mxu0 %v493
      %514 = vmatprep.subr.bf16.mxu0 0
      %515 = vmatpush1.bf16.msra.mxu0 %v494
      %516 = vmatprep.subr.bf16.mxu0 0
      %517 = vmatpush1.bf16.msra.mxu0 %v495
      %518 = vmatprep.subr.bf16.mxu0 0
      %519 = vmatpush1.bf16.msra.mxu0 %v496
      %520 = vmatprep.subr.bf16.mxu0 0
      %521 = vmatpush1.bf16.msra.mxu0 %v497
      %522 = vmatprep.subr.bf16.mxu0 0
      %523 = vmatpush1.bf16.msra.mxu0 0
      %524 = vmatprep.subr.bf16.mxu0 0
      %525 = vmatpush1.bf16.msra.mxu0 0
      %526 = vmatprep.subr.bf16.mxu0 0
      %527 = vmatpush1.bf16.msra.mxu0 0
      %528 = vmatprep.subr.bf16.mxu0 0
      %529 = vmatpush1.bf16.msra.mxu0 0
      %530 = vmatprep.subr.bf16.mxu0 0
      %531 = vmatpush1.bf16.msra.mxu0 0
      %532 = vmatprep.subr.bf16.mxu0 0
      %533 = vmatpush1.bf16.msra.mxu0 0
      %534 = vmatprep.subr.bf16.mxu0 0
      %535 = vmatpush1.bf16.msra.mxu0 0
      %536 = vmatprep.subr.bf16.mxu0 0
      %537 = vmatpush1.bf16.msra.mxu0 0
      %538 = vmatprep.mubr.bf16.mxu0 0
      %539 = vmatmul.mubr.bf16.gmra.mrb[0].mxu0 %v431
      %v540 = vpop.f32.mrb[0].mxu0
      %v541 = vadd.f32 %v456, %v540
      %v542 = vpop.f32.mrb[0].mxu0
      %v543 = vpop.f32.mrb[0].mxu0
      %v544 = vadd.f32 %v456, %v543
      %v545 = vpop.f32.mrb[0].mxu0
      %546 = vmatprep.mubr.bf16.mxu0 0
      %547 = vmatmul.mubr.bf16.gmra.mrb[0].mxu0 %v432
      %v548 = vpop.f32.mrb[0].mxu0
      %v549 = vadd.f32 %v456, %v548
      %v550 = vpop.f32.mrb[0].mxu0
      %v551 = vpop.f32.mrb[0].mxu0
      %v552 = vadd.f32 %v456, %v551
      %v553 = vpop.f32.mrb[0].mxu0
      %554 = vmatprep.mubr.bf16.mxu0 0
      %555 = vmatmul.mubr.bf16.gmra.mrb[0].mxu0 %v433
      %v556 = vpop.f32.mrb[0].mxu0
      %v557 = vadd.f32 %v456, %v556
      %v558 = vpop.f32.mrb[0].mxu0
      %v559 = vpop.f32.mrb[0].mxu0
      %v560 = vadd.f32 %v456, %v559
      %v561 = vpop.f32.mrb[0].mxu0
      %562 = vmatprep.mubr.bf16.mxu0 0
      %563 = vmatmul.mubr.bf16.gmra.mrb[0].mxu0 %v434
      %v564 = vpop.f32.mrb[0].mxu0
      %v565 = vadd.f32 %v456, %v564
      %v566 = vpop.f32.mrb[0].mxu0
      %v567 = vpop.f32.mrb[0].mxu0
      %v568 = vpop.f32.mrb[0].mxu0
      %569 = vdwg.mxu0
      %vm570 = vcmp.gt.f32.partialorder %v541, 0.0
      %vm571 = vcmp.gt.f32.partialorder %v544, 0.0
      %vm572 = vcmp.gt.f32.partialorder %v549, 0.0
      %vm573 = vcmp.gt.f32.partialorder %v552, 0.0
      %vm574 = vcmp.gt.f32.partialorder %v557, 0.0
      %vm575 = vcmp.gt.f32.partialorder %v560, 0.0
      %vm576 = vcmp.gt.f32.partialorder %v565, 0.0
      %v577 = vmul.f32 %v541, 0.01
      %v578 = vmul.f32 %v544, 0.01
      %v579 = vmul.f32 %v549, 0.01
      %v580 = vmul.f32 %v552, 0.01
      %v581 = vmul.f32 %v557, 0.01
      %v582 = vmul.f32 %v560, 0.01
      %v583 = vmul.f32 %v565, 0.01
      %v584 = vsel %vm570, %v541, %v577
      %v585 = vsel %vm571, %v544, %v578
      %v586 = vsel %vm572, %v549, %v579
      %v587 = vsel %vm573, %v552, %v580
      %v588 = vsel %vm574, %v557, %v581
      %v589 = vsel %vm575, %v560, %v582
      %v590 = vsel %vm576, %v565, %v583
      %v591 = vpack.c.bf16 %v585, %v584
      %v592 = vpack.c.bf16 %v587, %v586
      %v593 = vpack.c.bf16 %v589, %v588
      %v594 = vpack.c.bf16 %v590, %v590
      %v595 = vld [vmem:[%s5] sm:$0xf]
      %v596 = vld [vmem:[%s5 + $0x4] sm:$0xf]
      %v597 = vld [vmem:[%s5 + $0x8] sm:$0xf]
      %v598 = vld [vmem:[%s5 + $0xc] sm:$0xf]
      %v599 = vld [vmem:[%s5 + $0x10] sm:$0xf]
      %v600 = vld [vmem:[%s5 + $0x14] sm:$0xf]
      %v601 = vld [vmem:[%s5 + $0x18] sm:$0xf]
      %v602 = vld [vmem:[%s5 + $0x1c] sm:$0xf]
      %v603 = vld [vmem:[%s5 + $0x20] sm:$0xf]
      %v604 = vld [vmem:[%s5 + $0x24] sm:$0xf]
      %v605 = vld [vmem:[%s5 + $0x28] sm:$0xf]
      %v606 = vld [vmem:[%s5 + $0x2c] sm:$0xf]
      %v607 = vld [vmem:[%s5 + $0x30] sm:$0xf]
      %v608 = vld [vmem:[%s5 + $0x34] sm:$0xf]
      %v609 = vld [vmem:[%s5 + $0x38] sm:$0xf]
      %v610 = vld [vmem:[%s5 + $0x3c] sm:$0xf]
      %v611 = vld [vmem:[%s6] sm:$0x1]
      %v613 = vlaneseq
      %v614 = vshrl.u32 %v613, 7
      %v615 = vsub.s32 0, %v614
      %v616 = vrot.slane %v611, %v615
      %v634 = vunpack.c.l.b16 %v595
      %v635 = vunpack.c.l.b16 %v596
      %v636 = vunpack.c.l.b16 %v597
      %v637 = vunpack.c.l.b16 %v598
      %v638 = vunpack.c.l.b16 %v599
      %v639 = vunpack.c.l.b16 %v600
      %v640 = vunpack.c.l.b16 %v601
      %v641 = vunpack.c.l.b16 %v602
      %v642 = vunpack.c.l.b16 %v603
      %v643 = vunpack.c.l.b16 %v604
      %v644 = vunpack.c.l.b16 %v605
      %v645 = vunpack.c.l.b16 %v606
      %v646 = vunpack.c.l.b16 %v607
      %v647 = vunpack.c.l.b16 %v608
      %v648 = vunpack.c.l.b16 %v609
      %v649 = vunpack.c.l.b16 %v610
      %v650 = vpack.c.b16 %v635, %v634
      %v651 = vpack.c.b16 %v637, %v636
      %v652 = vpack.c.b16 %v639, %v638
      %v653 = vpack.c.b16 %v641, %v640
      %v654 = vpack.c.b16 %v643, %v642
      %v655 = vpack.c.b16 %v645, %v644
      %v656 = vpack.c.b16 %v647, %v646
      %v657 = vpack.c.b16 %v649, %v648
      %666 = vmatprep.subr.bf16.mxu0 0
      %667 = vmatpush1.bf16.msra.mxu0 %v650
      %668 = vmatprep.subr.bf16.mxu0 0
      %669 = vmatpush1.bf16.msra.mxu0 %v651
      %670 = vmatprep.subr.bf16.mxu0 0
      %671 = vmatpush1.bf16.msra.mxu0 %v652
      %672 = vmatprep.subr.bf16.mxu0 0
      %673 = vmatpush1.bf16.msra.mxu0 %v653
      %674 = vmatprep.subr.bf16.mxu0 0
      %675 = vmatpush1.bf16.msra.mxu0 %v654
      %676 = vmatprep.subr.bf16.mxu0 0
      %677 = vmatpush1.bf16.msra.mxu0 %v655
      %678 = vmatprep.subr.bf16.mxu0 0
      %679 = vmatpush1.bf16.msra.mxu0 %v656
      %680 = vmatprep.subr.bf16.mxu0 0
      %681 = vmatpush1.bf16.msra.mxu0 %v657
      %682 = vmatprep.subr.bf16.mxu0 0
      %683 = vmatpush1.bf16.msra.mxu0 0
      %684 = vmatprep.subr.bf16.mxu0 0
      %685 = vmatpush1.bf16.msra.mxu0 0
      %686 = vmatprep.subr.bf16.mxu0 0
      %687 = vmatpush1.bf16.msra.mxu0 0
      %688 = vmatprep.subr.bf16.mxu0 0
      %689 = vmatpush1.bf16.msra.mxu0 0
      %690 = vmatprep.subr.bf16.mxu0 0
      %691 = vmatpush1.bf16.msra.mxu0 0
      %692 = vmatprep.subr.bf16.mxu0 0
      %693 = vmatpush1.bf16.msra.mxu0 0
      %694 = vmatprep.subr.bf16.mxu0 0
      %695 = vmatpush1.bf16.msra.mxu0 0
      %696 = vmatprep.subr.bf16.mxu0 0
      %697 = vmatpush1.bf16.msra.mxu0 0
      %698 = vmatprep.mubr.bf16.mxu0 0
      %699 = vmatmul.mubr.bf16.gmra.mrb[0].mxu0 %v591
      %v700 = vpop.f32.mrb[0].mxu0
      %v701 = vadd.f32 %v616, %v700
      %v702 = vpop.f32.mrb[0].mxu0
      %v703 = vpop.f32.mrb[0].mxu0
      %v704 = vadd.f32 %v616, %v703
      %v705 = vpop.f32.mrb[0].mxu0
      %706 = vmatprep.mubr.bf16.mxu0 0
      %707 = vmatmul.mubr.bf16.gmra.mrb[0].mxu0 %v592
      %v708 = vpop.f32.mrb[0].mxu0
      %v709 = vadd.f32 %v616, %v708
      %v710 = vpop.f32.mrb[0].mxu0
      %v711 = vpop.f32.mrb[0].mxu0
      %v712 = vadd.f32 %v616, %v711
      %v713 = vpop.f32.mrb[0].mxu0
      %714 = vmatprep.mubr.bf16.mxu0 0
      %715 = vmatmul.mubr.bf16.gmra.mrb[0].mxu0 %v593
      %v716 = vpop.f32.mrb[0].mxu0
      %v717 = vadd.f32 %v616, %v716
      %v718 = vpop.f32.mrb[0].mxu0
      %v719 = vpop.f32.mrb[0].mxu0
      %v720 = vadd.f32 %v616, %v719
      %v721 = vpop.f32.mrb[0].mxu0
      %722 = vmatprep.mubr.bf16.mxu0 0
      %723 = vmatmul.mubr.bf16.gmra.mrb[0].mxu0 %v594
      %v724 = vpop.f32.mrb[0].mxu0
      %v725 = vadd.f32 %v616, %v724
      %v726 = vpop.f32.mrb[0].mxu0
      %v727 = vpop.f32.mrb[0].mxu0
      %v728 = vpop.f32.mrb[0].mxu0
      %729 = vdwg.mxu0
      %vm730 = vcmask 80896
      %731 = vst.msk [vmem:[%s280] sm:$0xff] %vm730, %v701
      %732 = vst.msk [vmem:[%s280 + $0x8] sm:$0xff] %vm730, %v704
      %733 = vst.msk [vmem:[%s280 + $0x10] sm:$0xff] %vm730, %v709
      %734 = vst.msk [vmem:[%s280 + $0x18] sm:$0xff] %vm730, %v712
      %735 = vst.msk [vmem:[%s280 + $0x20] sm:$0xff] %vm730, %v717
      %736 = vst.msk [vmem:[%s280 + $0x28] sm:$0xff] %vm730, %v720
      %737 = vst.msk [vmem:[%s280 + $0x30] sm:$0xff] %vm730, %v725
      %s738 = smul.u32 7, %s18
      %p739 = scmp.lt.s32.totalorder %s738, 13
      %s740 = scalar_select %p739, %s738, 13
      %s741 = smul.addr %s740, 8
      %s742 = scalar_lea.vmem %s7, %s741
      // Predicated region
      $region49: #{class_predictor_forward.1} parent=47 // pred_check
        %p743 = pneg %p188
      $region50: #{class_predictor_forward.1} parent=47 // pred_check_branch
        %745 = sbr.rel (%p743) target = $region52
      $region51: #{class_predictor_forward.1} parent=47 // pred_region
        %s746 = smul.u32 7, %s18
      $region52: #{class_predictor_forward.1} parent=47 // pred_fallthru
        _
    $region48: #{class_predictor_forward.1} parent=5 // pred_fallthru
      _
    %p747 = scmp.le.s32.totalorder 2, %s13
    // Predicated region
    $region53: #{class_predictor_forward.1} parent=5 // pred_check
      %p748 = pneg %p747
    $region54: #{class_predictor_forward.1} parent=5 // pred_check_branch
      %750 = sbr.rel (%p748) target = $region56
    $region55: #{class_predictor_forward.1} parent=5 // pred_region
      %s751 = ssub.s32 %s13, 2
      // Predicated region
      $region57: #{class_predictor_forward.1} parent=55 // pred_check
        %p752 = pneg %p194
      $region58: #{class_predictor_forward.1} parent=55 // pred_check_branch
        %754 = sbr.rel (%p752) target = $region60
      $region59: #{class_predictor_forward.1} parent=55 // pred_region
        %s755 = smul.u32 7, %s19
        %p756 = scmp.lt.s32.totalorder %s755, 13
        %s757 = scalar_select %p756, %s755, 13
        %s758 = smul.addr %s757, 8
        %s759 = scalar_lea.vmem %s7, %s758
      $region60: #{class_predictor_forward.1} parent=55 // pred_fallthru
        _
    $region56: #{class_predictor_forward.1} parent=5 // pred_fallthru
      _
  $region6: #{class_predictor_forward.1} parent=0 // loop_footer
    %s17 = sadd.s32 1, %s13
  $region7: #{class_predictor_forward.1} parent=0 // loop_footer_branch
    %12 = sbr.rel target = $region3
  $region8: #{class_predictor_forward.1} parent=0 // loop_exit
    _

</llo_original>
